<compile_context>
chip_gen: v6e
topology: v6e:2x2x1
jax: 0.10.0
libtpu: 0.0.40
codegen_flags: <defaults>
</compile_context>

<pallas_src>
import functools
import math

import jax
import jax.numpy as jnp
from jax.experimental import pallas as pl
from jax.experimental.pallas import tpu as pltpu


def _mse_partial_kernel(t_ref, s_ref, o_ref, acc_ref, *, inv_n):
    """Accumulate per-(sublane, lane) partial sums of squared differences.

    Grid = (splits, row_blocks): the inner "arbitrary" axis streams row tiles,
    the outer "parallel" axis lets v7x megacore shard rows across both
    TensorCores (harmless extra grid dim on v5e/v6e). Each split writes one
    scaled partial sum to its own SMEM scalar output block.
    """
    i = pl.program_id(1)

    @pl.when(i == 0)
    def _():
        acc_ref[...] = jnp.zeros_like(acc_ref)

    t = t_ref[...]
    s = s_ref[...]
    if t.dtype == jnp.float32:
        d = t - s
    else:
        # Narrow-dtype subtract, single upcast (halves cast work / vreg pressure).
        d = (t - s).astype(jnp.float32)
    sq = d * d

    # Pure leading-dim fold onto the (8, hidden) accumulator: VPU adds only,
    # no XLU cross-lane reduce and no SMEM scalar RMW inside the hot loop.
    tile, hidden = sq.shape
    acc_ref[...] += jnp.sum(sq.reshape(tile // 8, 8, hidden), axis=0)

    @pl.when(i == pl.num_programs(1) - 1)
    def _():
        # Single cross-lane/sublane reduce + mean scaling, once per split.
        o_ref[0, 0] = jnp.sum(acc_ref[...]) * jnp.float32(inv_n)


def _round_up(x, m):
    return ((x + m - 1) // m) * m


def embedding_mse_loss(teacher_hidden, student_hidden):
    """MSE loss (mean reduction) between two equally-shaped hidden-state tensors."""
    assert teacher_hidden.shape == student_hidden.shape
    assert teacher_hidden.dtype == student_hidden.dtype

    shape = teacher_hidden.shape
    hidden = shape[-1]
    total_n = math.prod(shape)
    rows = total_n // hidden

    t2 = teacher_hidden.reshape(rows, hidden)
    s2 = student_hidden.reshape(rows, hidden)

    itemsize = jnp.dtype(teacher_hidden.dtype).itemsize

    # --- Row-tile selection: largest tile whose double-buffered input DMAs fit a
    # v7x-portable VMEM budget (~40 MiB of pipeline buffers; v7x has 64 MiB/TC). ---
    vmem_buffer_budget = 40 * 1024 * 1024
    tile = 512
    while tile > 8 and 2 * 2 * tile * hidden * itemsize > vmem_buffer_budget:
        tile //= 2
    # Small inputs: one sublane-aligned (padded) block instead of tiny tiles.
    tile = min(tile, _round_up(rows, 8))

    row_blocks = pl.cdiv(rows, tile)
    # v7x megacore: shard row blocks across the 2 TensorCores when there is
    # enough work. Costs nothing on v5e/v6e (grid just gains a size-2 axis).
    splits = 2 if row_blocks >= 2 else 1
    row_blocks = _round_up(row_blocks, splits)
    padded_rows = row_blocks * tile

    if padded_rows != rows:
        # Zero-padding BOTH operands contributes exactly 0 to the sum of squares,
        # so dividing by the true total_n keeps the mean exact.
        pad = ((0, padded_rows - rows), (0, 0))
        t2 = jnp.pad(t2, pad)
        s2 = jnp.pad(s2, pad)

    inner_blocks = row_blocks // splits
    kernel = functools.partial(_mse_partial_kernel, inv_n=1.0 / float(total_n))

    def in_map(c, i):
        return (c * inner_blocks + i, 0)

    buffer_bytes = 2 * 2 * tile * hidden * itemsize  # 2 inputs x 2 pipeline buffers
    acc_bytes = 8 * hidden * 4
    vmem_limit = buffer_bytes + acc_bytes + (16 << 20)  # headroom; <= ~56 MiB worst case

    cost = pl.CostEstimate(
        flops=3 * total_n,  # sub, mul, add per element
        transcendentals=0,
        bytes_accessed=2 * total_n * itemsize + 4,
    )

    partials = pl.pallas_call(
        kernel,
        out_shape=jax.ShapeDtypeStruct((splits, 1), jnp.float32),
        grid_spec=pltpu.PrefetchScalarGridSpec(
            num_scalar_prefetch=0,
            grid=(splits, inner_blocks),
            in_specs=[
                pl.BlockSpec((tile, hidden), in_map),
                pl.BlockSpec((tile, hidden), in_map),
            ],
            out_specs=pl.BlockSpec(
                (1, 1), lambda c, i: (c, 0), memory_space=pltpu.SMEM
            ),
            scratch_shapes=[pltpu.VMEM((8, hidden), jnp.float32)],
        ),
        compiler_params=pltpu.CompilerParams(
            dimension_semantics=("parallel", "arbitrary"),
            vmem_limit_bytes=vmem_limit,
        ),
        cost_estimate=cost,
    )(t2, s2)

    # Each split's partial is already scaled by 1/N; summing them gives the mean.
    return jnp.sum(partials)


class LossEmbeddingMSE:
    """JAX/Pallas port of the PyTorch LossEmbeddingMSE module (no parameters)."""

    def __call__(self, teacher_outputs, student_outputs, *args, **kwargs):
        return self.forward(teacher_outputs, student_outputs)

    def forward(self, teacher_outputs, student_outputs):
        return embedding_mse_loss(
            teacher_outputs["hidden_states"][0],
            student_outputs["hidden_states"][0],
        )


if __name__ == "__main__":
    # Small shapes implied by the forward: hidden_states[0] ~ [batch, seq, hidden]
    batch, seq, hidden = 2, 8, 32
    key = jax.random.PRNGKey(0)
    k_t, k_s = jax.random.split(key)
    teacher_h = jax.random.normal(k_t, (batch, seq, hidden), dtype=jnp.float32)
    student_h = jax.random.normal(k_s, (batch, seq, hidden), dtype=jnp.float32)

    teacher_outputs = {"hidden_states": [teacher_h]}
    student_outputs = {"hidden_states": [student_h]}

    loss_fn = LossEmbeddingMSE()
    loss = loss_fn(teacher_outputs, student_outputs)
    jax.block_until_ready(loss)

    # Reference check (plain JAX) to confirm MSE semantics.
    ref = jnp.mean((teacher_h - student_h) ** 2)
    assert jnp.allclose(loss, ref, rtol=1e-5, atol=1e-6), (loss, ref)

    # Also exercise a non-divisible / multi-tile path (padding + 2-way split).
    b2, s2_, h2 = 3, 100, 256
    t2 = jax.random.normal(jax.random.PRNGKey(1), (b2, s2_, h2), dtype=jnp.float32)
    s2v = jax.random.normal(jax.random.PRNGKey(2), (b2, s2_, h2), dtype=jnp.float32)
    loss2 = embedding_mse_loss(t2, s2v)
    jax.block_until_ready(loss2)
    ref2 = jnp.mean((t2 - s2v) ** 2)
    assert jnp.allclose(loss2, ref2, rtol=1e-5, atol=1e-6), (loss2, ref2)

    print("KERNEL_OK")
</pallas_src>

<mosaic_0001>
module attributes {stable_mosaic.version = 11 : i64} {
  func.func @_mse_partial_kernel(%arg0: i32, %arg1: i32, %arg2: memref<16x32xf32, #tpu.memory_space<vmem>>, %arg3: memref<16x32xf32, #tpu.memory_space<vmem>>, %arg4: memref<1x1xf32, #tpu.memory_space<smem>>, %arg5: memref<8x32xf32, #tpu.memory_space<vmem>>) attributes {dimension_semantics = [#tpu.dimension_semantics<parallel>, #tpu.dimension_semantics<arbitrary>], iteration_bounds = array<i64: 1, 1>, scalar_prefetch = 0 : i64, scratch_operands = 1 : i64, tpu.core_type = #tpu.core_type<tc>, window_params = [{transform_indices = @transform_0, window_bounds = array<i64: 16, 32>}, {transform_indices = @transform_1, window_bounds = array<i64: 16, 32>}, {transform_indices = @transform_2, window_bounds = array<i64: 1, 1>}]} {
    %c0_i32 = arith.constant 0 : i32
    %0 = arith.cmpi eq, %arg1, %c0_i32 : i32
    %1 = arith.extui %0 : i1 to i32
    %c0_i32_0 = arith.constant 0 : i32
    %2 = arith.cmpi ne, %1, %c0_i32_0 : i32
    scf.if %2 {
      %cst_10 = arith.constant 0.000000e+00 : f32
      %15 = vector.broadcast %cst_10 : f32 to vector<8x32xf32>
      %c0_11 = arith.constant 0 : index
      %c0_12 = arith.constant 0 : index
      %16 = vector.load %arg5[%c0_11, %c0_12] : memref<8x32xf32, #tpu.memory_space<vmem>>, vector<8x32xf32>
      tpu.vector_store %arg5[%c0_11, %c0_12], %15 {strides = array<i32>} : memref<8x32xf32, #tpu.memory_space<vmem>>, vector<8x32xf32>,
    } else {
    }
    %c0 = arith.constant 0 : index
    %c0_1 = arith.constant 0 : index
    %3 = vector.load %arg2[%c0, %c0_1] : memref<16x32xf32, #tpu.memory_space<vmem>>, vector<16x32xf32>
    %c0_2 = arith.constant 0 : index
    %c0_3 = arith.constant 0 : index
    %4 = vector.load %arg3[%c0_2, %c0_3] : memref<16x32xf32, #tpu.memory_space<vmem>>, vector<16x32xf32>
    %5 = arith.subf %3, %4 : vector<16x32xf32>
    %6 = arith.mulf %5, %5 : vector<16x32xf32>
    %c0_4 = arith.constant 0 : index
    %c0_5 = arith.constant 0 : index
    %7 = vector.load %arg5[%c0_4, %c0_5] : memref<8x32xf32, #tpu.memory_space<vmem>>, vector<8x32xf32>
    %8 = vector.shape_cast %6 : vector<16x32xf32> to vector<2x8x32xf32>
    %cst = arith.constant dense<0.000000e+00> : vector<8x32xf32>
    %9 = vector.multi_reduction <add>, %8, %cst [0] : vector<2x8x32xf32> to vector<8x32xf32>
    %10 = arith.addf %7, %9 : vector<8x32xf32>
    %c0_6 = arith.constant 0 : index
    %c0_7 = arith.constant 0 : index
    %11 = vector.load %arg5[%c0_6, %c0_7] : memref<8x32xf32, #tpu.memory_space<vmem>>, vector<8x32xf32>
    tpu.vector_store %arg5[%c0_6, %c0_7], %10 {strides = array<i32>} : memref<8x32xf32, #tpu.memory_space<vmem>>, vector<8x32xf32>,
    %c0_i32_8 = arith.constant 0 : i32
    %12 = arith.cmpi eq, %arg1, %c0_i32_8 : i32
    %13 = arith.extui %12 : i1 to i32
    %c0_i32_9 = arith.constant 0 : i32
    %14 = arith.cmpi ne, %13, %c0_i32_9 : i32
    scf.if %14 {
      %c0_10 = arith.constant 0 : index
      %c0_11 = arith.constant 0 : index
      %15 = vector.load %arg5[%c0_10, %c0_11] : memref<8x32xf32, #tpu.memory_space<vmem>>, vector<8x32xf32>
      %16 = vector.shape_cast %15 : vector<8x32xf32> to vector<1x8x32xf32>
      %cst_12 = arith.constant dense<0.000000e+00> : vector<1xf32>
      %17 = vector.multi_reduction <add>, %16, %cst_12 [1, 2] : vector<1x8x32xf32> to vector<1xf32>
      %18 = vector.shape_cast %17 : vector<1xf32> to vector<1x1x1xf32>
      %19 = vector.extract %18[0, 0, 0] : f32 from vector<1x1x1xf32>
      %cst_13 = arith.constant 0.001953125 : f32
      %20 = arith.mulf %19, %cst_13 : f32
      %c0_14 = arith.constant 0 : index
      %c0_15 = arith.constant 0 : index
      %21 = memref.load %arg4[%c0_14, %c0_15] : memref<1x1xf32, #tpu.memory_space<smem>>
      memref.store %20, %arg4[%c0_14, %c0_15] : memref<1x1xf32, #tpu.memory_space<smem>>
    } else {
    }
    return
  }
  func.func @transform_0(%arg0: i32, %arg1: i32) -> (i32, i32) {
    %c1_i32 = arith.constant 1 : i32
    %0 = arith.muli %arg0, %c1_i32 : i32
    %1 = arith.addi %0, %arg1 : i32
    %c0_i32 = arith.constant 0 : i32
    %c0_i32_0 = arith.constant 0 : i32
    return %1, %c0_i32 : i32, i32
  }
  func.func @transform_1(%arg0: i32, %arg1: i32) -> (i32, i32) {
    %c1_i32 = arith.constant 1 : i32
    %0 = arith.muli %arg0, %c1_i32 : i32
    %1 = arith.addi %0, %arg1 : i32
    %c0_i32 = arith.constant 0 : i32
    %c0_i32_0 = arith.constant 0 : i32
    return %1, %c0_i32 : i32, i32
  }
  func.func @transform_2(%arg0: i32, %arg1: i32) -> (i32, i32) {
    %c0_i32 = arith.constant 0 : i32
    %c0_i32_0 = arith.constant 0 : i32
    return %arg0, %c0_i32 : i32, i32
  }
}

</mosaic_0001>

<llo_original>
// kernel: tpu_custom_call.1
$region0: #{tpu_custom_call.1}
  #allocation0 [shape = 'u32[]', space=smem, size = 0x4, offset = 0x4, fixed_abs, tag = 'smem constant byte address 0x4 - core index']
  #allocation1 [shape = 'u32[144,128]{1,0:T(1,128)}', space=vmem, size = 0x12000, scoped, tag = 'internal scratch']
  #allocation2 [shape = 'f32[8,32]{1,0:T(8,128)}', space=vmem, size = 0x1000, scoped, tag = 'scratch operand']
  %s0 = inlined_call_operand.hbm [shape: f32[16,32], index: 0, kind: input, shape index: {}]
  %s1 = inlined_call_operand.hbm [shape: f32[16,32], index: 1, kind: input, shape index: {}]
  %s2 = inlined_call_operand.hbm [shape: f32[1,1], index: 2, kind: output, shape index: {}]
  %s3 = sld [smem:[#allocation0]]
  $region34: #{tpu_custom_call.1} parent=0
    _
  %s5 = ssub.s32 1, %s3
  %s6 = scalar_select 0, %s5, %s3
  $region1: #{tpu_custom_call.1} parent=0
    #allocation3 [shape = 'u8[8192]{0}', space=vmem, size = 0x2000, scoped, tag = 'input window, operand 0, single buffered']
    #allocation4 [shape = 's32[1]{0}', space=sflag, size = 0x4, scoped, tag = 'scoped memory for tpu_custom_call.1']
    #allocation5 [shape = 's32[1]{0}', space=sflag, size = 0x4, scoped, tag = 'scoped memory for tpu_custom_call.1']
    #allocation6 [shape = 'u8[8192]{0}', space=vmem, size = 0x2000, scoped, tag = 'input window, operand 1, single buffered']
    #allocation7 [shape = 's32[1]{0}', space=sflag, size = 0x4, scoped, tag = 'scoped memory for tpu_custom_call.1']
    #allocation8 [shape = 'u8[512]{0}', space=smem, size = 0x200, scoped, tag = 'output window, operand 0, single buffered']
    %7 = vsyncpa [#allocation4], 0
    %8 = vsyncpa [#allocation7], 0
    %9 = vsyncpa [#allocation5], 0
    // Predicated region
    $region2: #{tpu_custom_call.1} parent=1 // pred_check
      _
    $region3: #{tpu_custom_call.1} parent=1 // pred_check_branch
      %11 = sbr.rel (0) target = $region5
    $region4: #{tpu_custom_call.1} parent=1 // pred_region
      %s12 = sadd.s32 0, 0
      %s13 = smul.u32 2, %s12
      %s15 = ssub.s32 256, 256
      %16 = vsyncadd [#allocation4], %s15
      %s17 = smul.addr %s13, 128
      %s18 = scalar_lea.hbm %s0, %s17
      %s19 = sshll.u32 [#allocation3], 4
      %s20 = int_to_ptr.vmem [resolvable:$true] %s19
      %25 = dma.hbm_to_vmem [thread:$0]  %s18, 256, %s20, [#allocation4], 128, 128, 8
    $region5: #{tpu_custom_call.1} parent=1 // pred_fallthru
      _
    // Predicated region
    $region6: #{tpu_custom_call.1} parent=1 // pred_check
      _
    $region7: #{tpu_custom_call.1} parent=1 // pred_check_branch
      %27 = sbr.rel (0) target = $region9
    $region8: #{tpu_custom_call.1} parent=1 // pred_region
      %s28 = sadd.s32 0, 0
      %s29 = smul.u32 2, %s28
      %s31 = ssub.s32 256, 256
      %32 = vsyncadd [#allocation7], %s31
      %s33 = smul.addr %s29, 128
      %s34 = scalar_lea.hbm %s1, %s33
      %s35 = sshll.u32 [#allocation6], 4
      %s36 = int_to_ptr.vmem [resolvable:$true] %s35
      %41 = dma.hbm_to_vmem [thread:$0]  %s34, 256, %s36, [#allocation7], 128, 128, 8
    $region9: #{tpu_custom_call.1} parent=1 // pred_fallthru
      _
    // Predicated region
    $region10: #{tpu_custom_call.1} parent=1 // pred_check
      _
    $region11: #{tpu_custom_call.1} parent=1 // pred_check_branch
      %43 = sbr.rel (0) target = $region13
    $region12: #{tpu_custom_call.1} parent=1 // pred_region
      %44 = dma.done [#allocation4], 256
    $region13: #{tpu_custom_call.1} parent=1 // pred_fallthru
      _
    // Predicated region
    $region14: #{tpu_custom_call.1} parent=1 // pred_check
      _
    $region15: #{tpu_custom_call.1} parent=1 // pred_check_branch
      %46 = sbr.rel (0) target = $region17
    $region16: #{tpu_custom_call.1} parent=1 // pred_region
      %47 = dma.done [#allocation7], 256
    $region17: #{tpu_custom_call.1} parent=1 // pred_fallthru
      _
    %s48 = sadd.s32 0, 0
    %s49 = smul.u32 2, %s48
    %s50 = sadd.s32 0, 0
    %s51 = smul.u32 2, %s50
    %p52 = scmp.eq.s32.totalorder 0, 0
    // Predicated region
    $region18: #{tpu_custom_call.1} parent=1 // pred_check
      %p53 = pneg %p52
    $region19: #{tpu_custom_call.1} parent=1 // pred_check_branch
      %55 = sbr.rel (%p53) target = $region21
    $region20: #{tpu_custom_call.1} parent=1 // pred_region
      %vm56 = vcmask 261120
      %57 = vst.msk [vmem:[#allocation2] sm:$0xff] %vm56, 0.0
    $region21: #{tpu_custom_call.1} parent=1 // pred_fallthru
      _
    %v58 = vld [vmem:[#allocation3] sm:$0xff]
    %v59 = vld [vmem:[#allocation3 + $0x8] sm:$0xff]
    %v60 = vld [vmem:[#allocation6] sm:$0xff]
    %v61 = vld [vmem:[#allocation6 + $0x8] sm:$0xff]
    %v62 = vsub.f32 %v58, %v60
    %v63 = vsub.f32 %v59, %v61
    %v64 = vmul.f32 %v62, %v62
    %v65 = vmul.f32 %v63, %v63
    %v66 = vld [vmem:[#allocation2] sm:$0xff]
    %vm67 = vcmask 261120
    %v68 = vsel %vm67, %v64, 0.0
    %v69 = vsel %vm67, %v65, 0.0
    %v70 = vadd.f32 %v68, %v69
    %v71 = vadd.f32 %v66, %v70
    %72 = vst.msk [vmem:[#allocation2] sm:$0xff] %vm67, %v71
    // Predicated region
    $region22: #{tpu_custom_call.1} parent=1 // pred_check
      %p73 = pneg %p52
    $region23: #{tpu_custom_call.1} parent=1 // pred_check_branch
      %75 = sbr.rel (%p73) target = $region25
    $region24: #{tpu_custom_call.1} parent=1 // pred_region
      %v76 = vld [vmem:[#allocation2] sm:$0xff]
      %v77 = vsel %vm67, %v76, 0.0
      %78 = vadd.xlane.f32.xlu0 %v77
      %v79 = vpop.xlane.xlu0 %78
      %v80 = vrot.slane %v79, 4
      %v81 = vadd.f32 %v79, %v80
      %v82 = vrot.slane %v81, 2
      %v83 = vadd.f32 %v81, %v82
      %v84 = vrot.slane %v83, 1
      %v85 = vadd.f32 %v83, %v84
      %s86 = vtos %v85
      %s87 = smul.f32 %s86, 0.001953125
      %s88 = scalar_lea.smem [#allocation8], 0
      %89 = sst [smem:[%s88]] %s87
    $region25: #{tpu_custom_call.1} parent=1 // pred_fallthru
      _
    // Predicated region
    $region26: #{tpu_custom_call.1} parent=1 // pred_check
      _
    $region27: #{tpu_custom_call.1} parent=1 // pred_check_branch
      %91 = sbr.rel (0) target = $region29
    $region28: #{tpu_custom_call.1} parent=1 // pred_region
      %s93 = ssub.s32 16, 16
      %94 = vsyncadd [#allocation5], %s93
      %97 = dma.smem_to_hbm [#allocation8], 16, %s2, [#allocation5]
    $region29: #{tpu_custom_call.1} parent=1 // pred_fallthru
      _
    // Predicated region
    $region30: #{tpu_custom_call.1} parent=1 // pred_check
      _
    $region31: #{tpu_custom_call.1} parent=1 // pred_check_branch
      %99 = sbr.rel (0) target = $region33
    $region32: #{tpu_custom_call.1} parent=1 // pred_region
      %100 = dma.done [#allocation5], 16
    $region33: #{tpu_custom_call.1} parent=1 // pred_fallthru
      _
    %101 = sfence
    %102 = vsyncpa [#allocation4], 1
    %103 = vsyncpa [#allocation7], 1
    %104 = vsyncpa [#allocation5], 1

</llo_original>
